<compile_context>
chip_gen: v6e
topology: v6e:2x2x1
jax: 0.10.0
libtpu: 0.0.40
codegen_flags: <defaults>
</compile_context>

<pallas_src>
import jax
import jax.numpy as jnp
from jax.experimental import pallas as pl
from jax.experimental.pallas import tpu as pltpu


def _outconv_kernel(w_ref, b_ref, x_ref, o_ref):
    """One (batch, spatial-tile) step of the 1x1 conv.

    w_ref: (Cout, Cin) in SMEM (scalar-prefetched)
    b_ref: (Cout,)     in SMEM (scalar-prefetched)
    x_ref: (Cin, T)    VMEM tile, T spatial elements on lanes
    o_ref: (Cout, T)   VMEM tile
    """
    cout, cin = w_ref.shape
    x = x_ref[...].astype(jnp.float32)          # (Cin, T), f32 VPU math (v5e-safe)
    t = x.shape[1]
    # Fully unrolled: Cout*Cin broadcast multiply-adds on the VPU.
    for co in range(cout):
        acc = jnp.full((1, t), b_ref[co], dtype=jnp.float32)
        for ci in range(cin):
            acc = acc + w_ref[co, ci] * x[ci:ci + 1, :]
        o_ref[co:co + 1, :] = acc.astype(o_ref.dtype)


def outconv_forward(x_nchw, weight, bias, *, max_tile=4096):
    """1x1 Conv2d(in_ch, out_ch) with bias.  NCHW in, NCHW out.

    x_nchw: (N, Cin, H, W)
    weight: (Cout, Cin)   -- squeezed from PyTorch's (Cout, Cin, 1, 1)
    bias:   (Cout,)
    returns (N, Cout, H, W)
    """
    N, Cin, H, W = x_nchw.shape
    Cout = weight.shape[0]
    HW = H * W

    # Free reshape (no transpose / extra HBM traffic): spatial dim on lanes.
    x3 = x_nchw.reshape(N, Cin, HW)

    # Spatial tile: whole row if it fits, else a large 128-aligned tile with a
    # Pallas-masked ragged tail block.
    if HW <= max_tile:
        tile = HW
    else:
        tile = max_tile - (max_tile % 128)
    num_t = pl.cdiv(HW, tile)

    w = weight.astype(jnp.float32)
    b = bias.astype(jnp.float32)

    out3 = pl.pallas_call(
        _outconv_kernel,
        out_shape=jax.ShapeDtypeStruct((N, Cout, HW), x_nchw.dtype),
        grid_spec=pltpu.PrefetchScalarGridSpec(
            num_scalar_prefetch=2,              # weight, bias -> SMEM, loaded once
            grid=(N, num_t),
            in_specs=[
                pl.BlockSpec((None, Cin, tile), lambda n, t, *_: (n, 0, t)),
            ],
            out_specs=pl.BlockSpec((None, Cout, tile), lambda n, t, *_: (n, 0, t)),
        ),
        compiler_params=pltpu.CompilerParams(
            dimension_semantics=("parallel", "parallel")),
    )(w, b, x3)

    # Free reshape back to NCHW.
    return out3.reshape(N, Cout, H, W)


if __name__ == "__main__":
    # Module config: outconv(in_ch=4, out_ch=3)
    in_ch, out_ch = 4, 3
    N, H, W = 2, 16, 16

    key = jax.random.PRNGKey(0)
    kx, kw, kb = jax.random.split(key, 3)

    x = jax.random.normal(kx, (N, in_ch, H, W), dtype=jnp.float32)
    # Deterministic parameter init (shapes match nn.Conv2d(in_ch, out_ch, 1))
    weight = jax.random.normal(kw, (out_ch, in_ch), dtype=jnp.float32) * 0.1
    bias = jax.random.normal(kb, (out_ch,), dtype=jnp.float32) * 0.1

    y = outconv_forward(x, weight, bias)
    jax.block_until_ready(y)

    # Reference check against plain JAX (einsum == 1x1 conv)
    y_ref = jnp.einsum("nchw,oc->nohw", x, weight) + bias[None, :, None, None]
    assert y.shape == (N, out_ch, H, W)
    assert jnp.allclose(y, y_ref, atol=1e-5, rtol=1e-5)

    print("KERNEL_OK")
</pallas_src>

<mosaic_0001>
module attributes {stable_mosaic.version = 11 : i64} {
  func.func @_outconv_kernel(%arg0: i32, %arg1: i32, %arg2: memref<3x4xf32, #tpu.memory_space<smem>>, %arg3: memref<3xf32, #tpu.memory_space<smem>>, %arg4: memref<1x4x256xf32, #tpu.memory_space<vmem>>, %arg5: memref<1x3x256xf32, #tpu.memory_space<vmem>>) attributes {dimension_semantics = [#tpu.dimension_semantics<parallel>, #tpu.dimension_semantics<parallel>], iteration_bounds = array<i64: 2, 1>, scalar_prefetch = 2 : i64, scratch_operands = 0 : i64, tpu.core_type = #tpu.core_type<tc>, window_params = [{transform_indices = @transform_0, window_bounds = array<i64: 1, 4, 256>}, {transform_indices = @transform_1, window_bounds = array<i64: 1, 3, 256>}]} {
    %c0 = arith.constant 0 : index
    %c0_0 = arith.constant 0 : index
    %c0_1 = arith.constant 0 : index
    %0 = vector.load %arg4[%c0, %c0_0, %c0_1] : memref<1x4x256xf32, #tpu.memory_space<vmem>>, vector<1x4x256xf32>
    %1 = vector.shape_cast %0 : vector<1x4x256xf32> to vector<4x256xf32>
    %c0_2 = arith.constant 0 : index
    %2 = memref.load %arg3[%c0_2] : memref<3xf32, #tpu.memory_space<smem>>
    %3 = vector.broadcast %2 : f32 to vector<1x256xf32>
    %c0_3 = arith.constant 0 : index
    %c0_4 = arith.constant 0 : index
    %4 = memref.load %arg2[%c0_3, %c0_4] : memref<3x4xf32, #tpu.memory_space<smem>>
    %5 = vector.extract_strided_slice %1 {offsets = [0, 0], sizes = [1, 256], strides = [1, 1]} : vector<4x256xf32> to vector<1x256xf32>
    %6 = vector.broadcast %4 : f32 to vector<1x256xf32>
    %7 = arith.mulf %6, %5 : vector<1x256xf32>
    %8 = arith.addf %3, %7 : vector<1x256xf32>
    %c0_5 = arith.constant 0 : index
    %c1 = arith.constant 1 : index
    %9 = memref.load %arg2[%c0_5, %c1] : memref<3x4xf32, #tpu.memory_space<smem>>
    %10 = vector.extract_strided_slice %1 {offsets = [1, 0], sizes = [1, 256], strides = [1, 1]} : vector<4x256xf32> to vector<1x256xf32>
    %11 = vector.broadcast %9 : f32 to vector<1x256xf32>
    %12 = arith.mulf %11, %10 : vector<1x256xf32>
    %13 = arith.addf %8, %12 : vector<1x256xf32>
    %c0_6 = arith.constant 0 : index
    %c2 = arith.constant 2 : index
    %14 = memref.load %arg2[%c0_6, %c2] : memref<3x4xf32, #tpu.memory_space<smem>>
    %15 = vector.extract_strided_slice %1 {offsets = [2, 0], sizes = [1, 256], strides = [1, 1]} : vector<4x256xf32> to vector<1x256xf32>
    %16 = vector.broadcast %14 : f32 to vector<1x256xf32>
    %17 = arith.mulf %16, %15 : vector<1x256xf32>
    %18 = arith.addf %13, %17 : vector<1x256xf32>
    %c0_7 = arith.constant 0 : index
    %c3 = arith.constant 3 : index
    %19 = memref.load %arg2[%c0_7, %c3] : memref<3x4xf32, #tpu.memory_space<smem>>
    %20 = vector.extract_strided_slice %1 {offsets = [3, 0], sizes = [1, 256], strides = [1, 1]} : vector<4x256xf32> to vector<1x256xf32>
    %21 = vector.broadcast %19 : f32 to vector<1x256xf32>
    %22 = arith.mulf %21, %20 : vector<1x256xf32>
    %23 = arith.addf %18, %22 : vector<1x256xf32>
    %c0_8 = arith.constant 0 : index
    %c0_9 = arith.constant 0 : index
    %c0_10 = arith.constant 0 : index
    %24 = vector.load %arg5[%c0_8, %c0_9, %c0_10] : memref<1x3x256xf32, #tpu.memory_space<vmem>>, vector<1x1x256xf32>
    %25 = vector.shape_cast %24 : vector<1x1x256xf32> to vector<1x256xf32>
    %26 = vector.shape_cast %23 : vector<1x256xf32> to vector<1x1x256xf32>
    tpu.vector_store %arg5[%c0_8, %c0_9, %c0_10], %26 {strides = array<i32>} : memref<1x3x256xf32, #tpu.memory_space<vmem>>, vector<1x1x256xf32>,
    %c1_11 = arith.constant 1 : index
    %27 = memref.load %arg3[%c1_11] : memref<3xf32, #tpu.memory_space<smem>>
    %28 = vector.broadcast %27 : f32 to vector<1x256xf32>
    %c1_12 = arith.constant 1 : index
    %c0_13 = arith.constant 0 : index
    %29 = memref.load %arg2[%c1_12, %c0_13] : memref<3x4xf32, #tpu.memory_space<smem>>
    %30 = vector.extract_strided_slice %1 {offsets = [0, 0], sizes = [1, 256], strides = [1, 1]} : vector<4x256xf32> to vector<1x256xf32>
    %31 = vector.broadcast %29 : f32 to vector<1x256xf32>
    %32 = arith.mulf %31, %30 : vector<1x256xf32>
    %33 = arith.addf %28, %32 : vector<1x256xf32>
    %c1_14 = arith.constant 1 : index
    %c1_15 = arith.constant 1 : index
    %34 = memref.load %arg2[%c1_14, %c1_15] : memref<3x4xf32, #tpu.memory_space<smem>>
    %35 = vector.extract_strided_slice %1 {offsets = [1, 0], sizes = [1, 256], strides = [1, 1]} : vector<4x256xf32> to vector<1x256xf32>
    %36 = vector.broadcast %34 : f32 to vector<1x256xf32>
    %37 = arith.mulf %36, %35 : vector<1x256xf32>
    %38 = arith.addf %33, %37 : vector<1x256xf32>
    %c1_16 = arith.constant 1 : index
    %c2_17 = arith.constant 2 : index
    %39 = memref.load %arg2[%c1_16, %c2_17] : memref<3x4xf32, #tpu.memory_space<smem>>
    %40 = vector.extract_strided_slice %1 {offsets = [2, 0], sizes = [1, 256], strides = [1, 1]} : vector<4x256xf32> to vector<1x256xf32>
    %41 = vector.broadcast %39 : f32 to vector<1x256xf32>
    %42 = arith.mulf %41, %40 : vector<1x256xf32>
    %43 = arith.addf %38, %42 : vector<1x256xf32>
    %c1_18 = arith.constant 1 : index
    %c3_19 = arith.constant 3 : index
    %44 = memref.load %arg2[%c1_18, %c3_19] : memref<3x4xf32, #tpu.memory_space<smem>>
    %45 = vector.extract_strided_slice %1 {offsets = [3, 0], sizes = [1, 256], strides = [1, 1]} : vector<4x256xf32> to vector<1x256xf32>
    %46 = vector.broadcast %44 : f32 to vector<1x256xf32>
    %47 = arith.mulf %46, %45 : vector<1x256xf32>
    %48 = arith.addf %43, %47 : vector<1x256xf32>
    %c0_20 = arith.constant 0 : index
    %c1_21 = arith.constant 1 : index
    %c0_22 = arith.constant 0 : index
    %49 = vector.load %arg5[%c0_20, %c1_21, %c0_22] : memref<1x3x256xf32, #tpu.memory_space<vmem>>, vector<1x1x256xf32>
    %50 = vector.shape_cast %49 : vector<1x1x256xf32> to vector<1x256xf32>
    %51 = vector.shape_cast %48 : vector<1x256xf32> to vector<1x1x256xf32>
    tpu.vector_store %arg5[%c0_20, %c1_21, %c0_22], %51 {strides = array<i32>} : memref<1x3x256xf32, #tpu.memory_space<vmem>>, vector<1x1x256xf32>,
    %c2_23 = arith.constant 2 : index
    %52 = memref.load %arg3[%c2_23] : memref<3xf32, #tpu.memory_space<smem>>
    %53 = vector.broadcast %52 : f32 to vector<1x256xf32>
    %c2_24 = arith.constant 2 : index
    %c0_25 = arith.constant 0 : index
    %54 = memref.load %arg2[%c2_24, %c0_25] : memref<3x4xf32, #tpu.memory_space<smem>>
    %55 = vector.extract_strided_slice %1 {offsets = [0, 0], sizes = [1, 256], strides = [1, 1]} : vector<4x256xf32> to vector<1x256xf32>
    %56 = vector.broadcast %54 : f32 to vector<1x256xf32>
    %57 = arith.mulf %56, %55 : vector<1x256xf32>
    %58 = arith.addf %53, %57 : vector<1x256xf32>
    %c2_26 = arith.constant 2 : index
    %c1_27 = arith.constant 1 : index
    %59 = memref.load %arg2[%c2_26, %c1_27] : memref<3x4xf32, #tpu.memory_space<smem>>
    %60 = vector.extract_strided_slice %1 {offsets = [1, 0], sizes = [1, 256], strides = [1, 1]} : vector<4x256xf32> to vector<1x256xf32>
    %61 = vector.broadcast %59 : f32 to vector<1x256xf32>
    %62 = arith.mulf %61, %60 : vector<1x256xf32>
    %63 = arith.addf %58, %62 : vector<1x256xf32>
    %c2_28 = arith.constant 2 : index
    %c2_29 = arith.constant 2 : index
    %64 = memref.load %arg2[%c2_28, %c2_29] : memref<3x4xf32, #tpu.memory_space<smem>>
    %65 = vector.extract_strided_slice %1 {offsets = [2, 0], sizes = [1, 256], strides = [1, 1]} : vector<4x256xf32> to vector<1x256xf32>
    %66 = vector.broadcast %64 : f32 to vector<1x256xf32>
    %67 = arith.mulf %66, %65 : vector<1x256xf32>
    %68 = arith.addf %63, %67 : vector<1x256xf32>
    %c2_30 = arith.constant 2 : index
    %c3_31 = arith.constant 3 : index
    %69 = memref.load %arg2[%c2_30, %c3_31] : memref<3x4xf32, #tpu.memory_space<smem>>
    %70 = vector.extract_strided_slice %1 {offsets = [3, 0], sizes = [1, 256], strides = [1, 1]} : vector<4x256xf32> to vector<1x256xf32>
    %71 = vector.broadcast %69 : f32 to vector<1x256xf32>
    %72 = arith.mulf %71, %70 : vector<1x256xf32>
    %73 = arith.addf %68, %72 : vector<1x256xf32>
    %c0_32 = arith.constant 0 : index
    %c2_33 = arith.constant 2 : index
    %c0_34 = arith.constant 0 : index
    %74 = vector.load %arg5[%c0_32, %c2_33, %c0_34] : memref<1x3x256xf32, #tpu.memory_space<vmem>>, vector<1x1x256xf32>
    %75 = vector.shape_cast %74 : vector<1x1x256xf32> to vector<1x256xf32>
    %76 = vector.shape_cast %73 : vector<1x256xf32> to vector<1x1x256xf32>
    tpu.vector_store %arg5[%c0_32, %c2_33, %c0_34], %76 {strides = array<i32>} : memref<1x3x256xf32, #tpu.memory_space<vmem>>, vector<1x1x256xf32>,
    return
  }
  func.func @transform_0(%arg0: i32, %arg1: i32, %arg2: memref<3x4xf32, #tpu.memory_space<smem>>, %arg3: memref<3xf32, #tpu.memory_space<smem>>) -> (i32, i32, i32) {
    %c0_i32 = arith.constant 0 : i32
    %c0_i32_0 = arith.constant 0 : i32
    return %arg0, %c0_i32, %arg1 : i32, i32, i32
  }
  func.func @transform_1(%arg0: i32, %arg1: i32, %arg2: memref<3x4xf32, #tpu.memory_space<smem>>, %arg3: memref<3xf32, #tpu.memory_space<smem>>) -> (i32, i32, i32) {
    %c0_i32 = arith.constant 0 : i32
    %c0_i32_0 = arith.constant 0 : i32
    return %arg0, %c0_i32, %arg1 : i32, i32, i32
  }
}

</mosaic_0001>

<llo_original>
// kernel: tpu_custom_call.1
$region0: #{tpu_custom_call.1}
  #allocation0 [shape = 'u32[]', space=smem, size = 0x4, offset = 0x4, fixed_abs, tag = 'smem constant byte address 0x4 - core index']
  #allocation1 [shape = 'u32[144,128]{1,0:T(1,128)}', space=vmem, size = 0x12000, scoped, tag = 'internal scratch']
  #allocation2 [shape = 's32[1]{0}', space=sflag, size = 0x4, scoped, tag = 'scoped memory for tpu_custom_call.1']
  #allocation3 [shape = 'u8[2048]{0}', space=smem, size = 0x800, scoped, tag = 'prefetched SMEM operand 0']
  #allocation4 [shape = 'u8[512]{0}', space=smem, size = 0x200, scoped, tag = 'prefetched SMEM operand 1']
  %s0 = inlined_call_operand.hbm [shape: f32[3,4], index: 0, kind: input, shape index: {}]
  %s1 = inlined_call_operand.vmem [shape: f32[3], index: 1, kind: input, shape index: {}]
  %s2 = inlined_call_operand.hbm [shape: f32[2,4,256], index: 2, kind: input, shape index: {}]
  %s3 = inlined_call_operand.vmem [shape: f32[2,3,256], index: 3, kind: output, shape index: {}]
  %s4 = sld [smem:[#allocation0]]
  $region41: #{tpu_custom_call.1} parent=0
    _
  %s6 = ssub.s32 1, %s4
  %s7 = scalar_select 0, %s6, %s4
  %9 = dma.hbm_to_smem %s0, 64, [#allocation3], [#allocation2]
  %s10 = sshll.u32 %s1, 4
  %s11 = int_to_ptr.vmem [resolvable:$true] %s10
  %13 = dma.vmem_to_smem %s11, 16, [#allocation4], [#allocation2]
  %14 = dma.done [#allocation2], 80
  %15 = sfence
  $region1: #{tpu_custom_call.1} parent=0
    #allocation5 [shape = 'u8[8192]{0}', space=vmem, size = 0x2000, scoped, tag = 'input window, operand 2']
    #allocation6 [shape = 's32[2]{0}', space=sflag, size = 0x8, scoped, tag = 'scoped memory for tpu_custom_call.1']
    %16 = vsyncpa [#allocation6], 0
    %s17 = scalar_lea.sflag [#allocation6], 1
    %18 = vsyncpa %s17, 0
    loop: start=0, step=1, limit=4
    $region2: #{tpu_custom_call.1} parent=1 // loop_pre_header
      _
    $region3: #{tpu_custom_call.1} parent=1 // loop_header
      %s20 = sphi 0, %s24
      %p21 = scmp.ge.s32.totalorder %s20, 4
      %s27 = sphi 0, %s39
      %s28 = sphi 0, %s35
      %s29 = sphi 0, %s27
      %s30 = sphi 0, %s28
      %s31 = sphi 0, %s29
      %s32 = sphi 0, %s30
      %s44 = sphi 0, %s46
      %s47 = sphi 0, %s44
      %s48 = sphi 0, %s47
      %s64 = sphi 0, %s48
      %s72 = sphi 0, %s74
      %s75 = sphi 0, %s72
      %s76 = sphi 0, %s75
      %s92 = sphi 0, %s76
    $region4: #{tpu_custom_call.1} parent=1 // loop_header_branch
      %23 = sbr.rel (%p21) target = $region8
    $region5: #{tpu_custom_call.1} parent=1 // loop_body
      %s25 = ssub.s32 %s20, 1
      %s26 = ssub.s32 %s20, 2
      %s33 = sadd.s32 1, %s28
      %p34 = scmp.ge.s32.totalorder %s33, 1
      %s35 = scalar_select %p34, 0, %s33
      %s36 = sadd.s32 1, %s27
      %s37 = scalar_select %p34, %s36, %s27
      %p38 = scmp.ge.s32.totalorder %s37, 2
      %s39 = scalar_select %p38, 0, %s37
      %s40 = ssub.s32 %s27, %s39
      %s41 = ssub.s32 %s28, %s35
      %s42 = sor.u32 %s40, %s41
      %p43 = scmp.eq.s32.totalorder %s42, 0
      %s45 = sadd.s32 %s44, 1
      %s46 = scalar_select %p43, %s44, %s45
      %p49 = pneg %p43
      %p50 = scmp.eq.s32.totalorder %s20, 1
      %p51 = por %p49, %p50
      %p52 = scmp.ne.s32.totalorder %s44, %s47
      %p53 = scmp.eq.s32.totalorder %s20, 0
      %p54 = por %p52, %p53
      %p55 = scmp.ne.s32.totalorder %s44, %s47
      %p56 = scmp.eq.s32.totalorder %s25, 1
      %p57 = por %p55, %p56
      %p58 = scmp.ne.s32.totalorder %s47, %s48
      %p59 = scmp.eq.s32.totalorder %s25, 0
      %p60 = por %p58, %p59
      %p61 = scmp.ne.s32.totalorder %s47, %s48
      %p62 = scmp.eq.s32.totalorder %s26, 1
      %p63 = por %p61, %p62
      %p65 = scmp.ne.s32.totalorder %s48, %s64
      %p66 = scmp.eq.s32.totalorder %s26, 0
      %p67 = por %p65, %p66
      %s68 = ssub.s32 %s27, %s39
      %s69 = ssub.s32 %s28, %s35
      %s70 = sor.u32 %s68, %s69
      %p71 = scmp.eq.s32.totalorder %s70, 0
      %s73 = sadd.s32 %s72, 1
      %s74 = scalar_select %p71, %s72, %s73
      %p77 = pneg %p71
      %p78 = scmp.eq.s32.totalorder %s20, 1
      %p79 = por %p77, %p78
      %p80 = scmp.ne.s32.totalorder %s72, %s75
      %p81 = scmp.eq.s32.totalorder %s20, 0
      %p82 = por %p80, %p81
      %p83 = scmp.ne.s32.totalorder %s72, %s75
      %p84 = scmp.eq.s32.totalorder %s25, 1
      %p85 = por %p83, %p84
      %p86 = scmp.ne.s32.totalorder %s75, %s76
      %p87 = scmp.eq.s32.totalorder %s25, 0
      %p88 = por %p86, %p87
      %p89 = scmp.ne.s32.totalorder %s75, %s76
      %p90 = scmp.eq.s32.totalorder %s26, 1
      %p91 = por %p89, %p90
      %p93 = scmp.ne.s32.totalorder %s76, %s92
      %p94 = scmp.eq.s32.totalorder %s26, 0
      %p95 = por %p93, %p94
      %p96 = scmp.le.s32.totalorder 1, %s20
      %p97 = scmp.lt.s32.totalorder %s20, 3
      %p98 = pnand %p96, %p97
      %p99 = pneg %p98
      // Predicated region
      $region9: #{tpu_custom_call.1} parent=5 // pred_check
        _
      $region10: #{tpu_custom_call.1} parent=5 // pred_check_branch
        %101 = sbr.rel (%p98) target = $region12
      $region11: #{tpu_custom_call.1} parent=5 // pred_region
        %s102 = ssub.s32 %s20, 1
      $region12: #{tpu_custom_call.1} parent=5 // pred_fallthru
        _
      %p103 = scmp.lt.s32.totalorder %s20, 2
      // Predicated region
      $region13: #{tpu_custom_call.1} parent=5 // pred_check
        %p104 = pneg %p103
      $region14: #{tpu_custom_call.1} parent=5 // pred_check_branch
        %106 = sbr.rel (%p104) target = $region16
      $region15: #{tpu_custom_call.1} parent=5 // pred_region
        // Predicated region
        $region17: #{tpu_custom_call.1} parent=15 // pred_check
          %p107 = pneg %p54
        $region18: #{tpu_custom_call.1} parent=15 // pred_check_branch
          %109 = sbr.rel (%p107) target = $region20
        $region19: #{tpu_custom_call.1} parent=15 // pred_region
          %s110 = sand.u32 %s44, 1
          %s111 = scalar_lea.sflag [#allocation6], %s110
          %s112 = sand.u32 %s44, 1
          %s113 = smul.addr %s112, 8
          %s114 = scalar_lea.vmem [#allocation5], %s113
          %s115 = smul.u32 2, %s28
          %s117 = ssub.s32 128, 128
          %118 = vsyncadd %s111, %s117
          %s119 = smul.addr %s27, 2
          %s120 = sadd.s32 %s115, %s119
          %s121 = smul.addr %s120, 64
          %s122 = scalar_lea.hbm %s2, %s121
          %s124 = sshll.u32 %s114, 4
          %s125 = int_to_ptr.vmem [resolvable:$true] %s124
          %127 = dma.hbm_to_vmem [thread:$0]  %s122, 128, %s125, %s111
        $region20: #{tpu_custom_call.1} parent=15 // pred_fallthru
          _
      $region16: #{tpu_custom_call.1} parent=5 // pred_fallthru
        _
      %p128 = scmp.le.s32.totalorder 1, %s20
      %p129 = scmp.lt.s32.totalorder %s20, 3
      %p130 = pnand %p128, %p129
      %p131 = pneg %p130
      // Predicated region
      $region21: #{tpu_custom_call.1} parent=5 // pred_check
        _
      $region22: #{tpu_custom_call.1} parent=5 // pred_check_branch
        %133 = sbr.rel (%p130) target = $region24
      $region23: #{tpu_custom_call.1} parent=5 // pred_region
        %s134 = ssub.s32 %s20, 1
        %s135 = sand.u32 %s47, 1
        %s136 = scalar_lea.sflag [#allocation6], %s135
        %s137 = sand.u32 %s47, 1
        %s138 = smul.addr %s137, 8
        %s139 = scalar_lea.vmem [#allocation5], %s138
        // Predicated region
        $region25: #{tpu_custom_call.1} parent=23 // pred_check
          %p140 = pneg %p60
        $region26: #{tpu_custom_call.1} parent=23 // pred_check_branch
          %142 = sbr.rel (%p140) target = $region28
        $region27: #{tpu_custom_call.1} parent=23 // pred_region
          %143 = dma.done %s136, 128
        $region28: #{tpu_custom_call.1} parent=23 // pred_fallthru
          _
        %s144 = sand.u32 %s47, 1
        %s145 = scalar_lea.sflag [#allocation6], %s144
        %s146 = sand.u32 %s47, 1
        %s147 = smul.addr %s146, 8
        %s148 = scalar_lea.vmem [#allocation5], %s147
        %p149 = pneg %p60
        %p150 = pneg %p57
        %p151 = pneg %p88
        %p152 = pneg %p85
        %s153 = smul.u32 2, %s30
        %p154 = scmp.lt.s32.totalorder %s29, 1
        %s155 = scalar_select %p154, %s29, 1
        %p156 = scmp.lt.s32.totalorder %s153, 1
        %s157 = scalar_select %p156, %s153, 1
        %s158 = smul.addr %s155, 2
        %s159 = sadd.s32 %s157, %s158
        %s160 = smul.addr %s159, 4
        %s161 = scalar_lea.vmem %s3, %s160
        %s162 = smul.u32 2, %s30
        %s163 = smul.u32 2, %s30
        %p164 = scmp.lt.s32.totalorder %s29, 1
        %s165 = scalar_select %p164, %s29, 1
        %p166 = scmp.lt.s32.totalorder %s163, 1
        %s167 = scalar_select %p166, %s163, 1
        %s168 = smul.addr %s165, 2
        %s169 = sadd.s32 %s167, %s168
        %s170 = smul.addr %s169, 4
        %s171 = scalar_lea.vmem %s3, %s170
        %s172 = smul.u32 2, %s30
        %v173 = vld [vmem:[%s139] sm:$0xff]
        %s174 = sld [smem:[#allocation4]]
        %v175 = vstv %s174
        %s176 = sld [smem:[#allocation3]]
        %v177 = vstv %s176
        %v178 = vmul.f32 %v177, %v173
        %v179 = vadd.f32 %v175, %v178
        %s180 = sld [smem:[#allocation3 + $0x1]]
        %v181 = vstv %s180
        %v182 = vmul.f32 %v181, %v173
        %v184 = vrot.slane %v182, 5
        %v185 = vrot.slane %v184, 4
        %v187 = vadd.f32 %v179, %v185
        %s188 = sld [smem:[#allocation3 + $0x2]]
        %v189 = vstv %s188
        %v190 = vmul.f32 %v189, %v173
        %v192 = vrot.slane %v190, 6
        %v193 = vrot.slane %v192, 4
        %v195 = vadd.f32 %v187, %v193
        %s196 = sld [smem:[#allocation3 + $0x3]]
        %v197 = vstv %s196
        %v198 = vmul.f32 %v197, %v173
        %v200 = vrot.slane %v198, 7
        %v201 = vrot.slane %v200, 4
        %v203 = vadd.f32 %v195, %v201
        %v206 = vunpack.c.l.s4 1966171168
        %v207 = vunpack.c.0.s8 %v206
        %v208 = vlaneseq
        %v209 = vshrl.u32 %v208, 7
        %v210 = vsub.s32 %v207, %v209
        %v211 = vrot.slane %v203, %v210
        %v213 = vunpack.c.l.s4 1966171168
        %v214 = vunpack.c.0.s8 %v213
        %v215 = vlaneseq
        %v216 = vshrl.u32 %v215, 7
        %v217 = vsub.s32 %v214, %v216
        %v218 = vrot.slane %v211, %v217
        %v220 = vlaneseq
        %vm221 = vcmp.ge.s32.totalorder %v220, 0
        %vm222 = vcmp.lt.s32.totalorder %v220, 256
        %vm223 = vmand %vm221, %vm222
        %224 = vst.msk [vmem:[%s171] ss:$4 sm:$0x3] %vm223, %v218
        %s225 = sld [smem:[#allocation4 + $0x1]]
        %v226 = vstv %s225
        %s227 = sld [smem:[#allocation3 + $0x80]]
        %v228 = vstv %s227
        %v229 = vmul.f32 %v228, %v173
        %v230 = vadd.f32 %v226, %v229
        %s231 = sld [smem:[#allocation3 + $0x81]]
        %v232 = vstv %s231
        %v233 = vmul.f32 %v232, %v173
        %v235 = vrot.slane %v233, 5
        %v236 = vrot.slane %v235, 4
        %v238 = vadd.f32 %v230, %v236
        %s239 = sld [smem:[#allocation3 + $0x82]]
        %v240 = vstv %s239
        %v241 = vmul.f32 %v240, %v173
        %v243 = vrot.slane %v241, 6
        %v244 = vrot.slane %v243, 4
        %v246 = vadd.f32 %v238, %v244
        %s247 = sld [smem:[#allocation3 + $0x83]]
        %v248 = vstv %s247
        %v249 = vmul.f32 %v248, %v173
        %v251 = vrot.slane %v249, 7
        %v252 = vrot.slane %v251, 4
        %v254 = vadd.f32 %v246, %v252
        %v257 = vunpack.c.l.s4 1966171168
        %v258 = vunpack.c.0.s8 %v257
        %v259 = vlaneseq
        %v260 = vshrl.u32 %v259, 7
        %v261 = vsub.s32 %v258, %v260
        %v262 = vrot.slane %v254, %v261
        %v264 = vunpack.c.l.s4 1966171168
        %v265 = vunpack.c.0.s8 %v264
        %v266 = vlaneseq
        %v267 = vshrl.u32 %v266, 7
        %v268 = vsub.s32 %v265, %v267
        %v269 = vrot.slane %v262, %v268
        %s271 = scalar_lea.vmem %s171, 1
        %272 = vst.msk [vmem:[%s271] ss:$4 sm:$0x3] %vm223, %v269
        %s273 = sld [smem:[#allocation4 + $0x2]]
        %v274 = vstv %s273
        %s275 = sld [smem:[#allocation3 + $0x100]]
        %v276 = vstv %s275
        %v277 = vmul.f32 %v276, %v173
        %v278 = vadd.f32 %v274, %v277
        %s279 = sld [smem:[#allocation3 + $0x101]]
        %v280 = vstv %s279
        %v281 = vmul.f32 %v280, %v173
        %v283 = vrot.slane %v281, 5
        %v284 = vrot.slane %v283, 4
        %v286 = vadd.f32 %v278, %v284
        %s287 = sld [smem:[#allocation3 + $0x102]]
        %v288 = vstv %s287
        %v289 = vmul.f32 %v288, %v173
        %v291 = vrot.slane %v289, 6
        %v292 = vrot.slane %v291, 4
        %v294 = vadd.f32 %v286, %v292
        %s295 = sld [smem:[#allocation3 + $0x103]]
        %v296 = vstv %s295
        %v297 = vmul.f32 %v296, %v173
        %v299 = vrot.slane %v297, 7
        %v300 = vrot.slane %v299, 4
        %v302 = vadd.f32 %v294, %v300
        %v305 = vunpack.c.l.s4 1966171168
        %v306 = vunpack.c.0.s8 %v305
        %v307 = vlaneseq
        %v308 = vshrl.u32 %v307, 7
        %v309 = vsub.s32 %v306, %v308
        %v310 = vrot.slane %v302, %v309
        %v312 = vunpack.c.l.s4 1966171168
        %v313 = vunpack.c.0.s8 %v312
        %v314 = vlaneseq
        %v315 = vshrl.u32 %v314, 7
        %v316 = vsub.s32 %v313, %v315
        %v317 = vrot.slane %v310, %v316
        %s319 = scalar_lea.vmem %s171, 2
        %320 = vst.msk [vmem:[%s319] ss:$4 sm:$0x3] %vm223, %v317
        %s321 = smul.u32 2, %s30
        %p322 = scmp.lt.s32.totalorder %s29, 1
        %s323 = scalar_select %p322, %s29, 1
        %p324 = scmp.lt.s32.totalorder %s321, 1
        %s325 = scalar_select %p324, %s321, 1
        %s326 = smul.addr %s323, 2
        %s327 = sadd.s32 %s325, %s326
        %s328 = smul.addr %s327, 4
        %s329 = scalar_lea.vmem %s3, %s328
        // Predicated region
        $region29: #{tpu_custom_call.1} parent=23 // pred_check
          %p330 = pneg %p85
        $region30: #{tpu_custom_call.1} parent=23 // pred_check_branch
          %332 = sbr.rel (%p330) target = $region32
        $region31: #{tpu_custom_call.1} parent=23 // pred_region
          %s333 = smul.u32 2, %s30
        $region32: #{tpu_custom_call.1} parent=23 // pred_fallthru
          _
      $region24: #{tpu_custom_call.1} parent=5 // pred_fallthru
        _
      %p334 = scmp.le.s32.totalorder 2, %s20
      // Predicated region
      $region33: #{tpu_custom_call.1} parent=5 // pred_check
        %p335 = pneg %p334
      $region34: #{tpu_custom_call.1} parent=5 // pred_check_branch
        %337 = sbr.rel (%p335) target = $region36
      $region35: #{tpu_custom_call.1} parent=5 // pred_region
        %s338 = ssub.s32 %s20, 2
        // Predicated region
        $region37: #{tpu_custom_call.1} parent=35 // pred_check
          %p339 = pneg %p91
        $region38: #{tpu_custom_call.1} parent=35 // pred_check_branch
          %341 = sbr.rel (%p339) target = $region40
        $region39: #{tpu_custom_call.1} parent=35 // pred_region
          %s342 = smul.u32 2, %s32
          %p343 = scmp.lt.s32.totalorder %s31, 1
          %s344 = scalar_select %p343, %s31, 1
          %p345 = scmp.lt.s32.totalorder %s342, 1
          %s346 = scalar_select %p345, %s342, 1
          %s347 = smul.addr %s344, 2
          %s348 = sadd.s32 %s346, %s347
          %s349 = smul.addr %s348, 4
          %s350 = scalar_lea.vmem %s3, %s349
        $region40: #{tpu_custom_call.1} parent=35 // pred_fallthru
          _
      $region36: #{tpu_custom_call.1} parent=5 // pred_fallthru
        _
    $region6: #{tpu_custom_call.1} parent=1 // loop_footer
      %s24 = sadd.s32 1, %s20
    $region7: #{tpu_custom_call.1} parent=1 // loop_footer_branch
      %19 = sbr.rel target = $region3
    $region8: #{tpu_custom_call.1} parent=1 // loop_exit
      _
    %351 = vsyncpa [#allocation6], 1
    %s352 = scalar_lea.sflag [#allocation6], 1
    %353 = vsyncpa %s352, 1

</llo_original>
